<compile_context>
chip_gen: v7x
topology: tpu7x:2x2x1
jax: 0.10.0
libtpu: 0.0.40
codegen_flags: <defaults>
</compile_context>

<pallas_src>
import jax
import jax.numpy as jnp
from jax.experimental import pallas as pl
from jax.experimental.pallas import tpu as pltpu


def _sigmoid_kernel(x_ref, o_ref):
    # Let Mosaic lower sigmoid itself: exact parity with the reference and the
    # kernel is latency-bound anyway (1 vs 2 EUP pushes is unmeasurable).
    o_ref[...] = jax.nn.sigmoid(x_ref[...])


def _sigmoid_2d(x2d):
    return pl.pallas_call(
        _sigmoid_kernel,
        out_shape=jax.ShapeDtypeStruct(x2d.shape, x2d.dtype),
        in_specs=[pl.BlockSpec(memory_space=pltpu.MemorySpace.VMEM)],
        out_specs=pl.BlockSpec(memory_space=pltpu.MemorySpace.VMEM),
        # Elementwise, same shape/dtype -> reuse the input buffer for the output.
        input_output_aliases={0: 0},
    )(x2d)


@jax.jit
def _sigmoid_pallas_jit(x):
    n, c, h, w = x.shape
    # Flatten to a lane-dense 2-D slab (channel axis on lanes; H=W=1 so this
    # matches NCHW contiguity exactly). Whole array is one block, so the
    # (8,128) tiling constraint does not apply.
    x2d = x.reshape(n, c * h * w)
    return _sigmoid_2d(x2d).reshape(n, c, h, w)


# Donate the input so the in-kernel aliasing propagates to the HBM buffer.
sigmoid_pallas = jax.jit(_sigmoid_pallas_jit, donate_argnums=0)


if __name__ == "__main__":
    key = jax.random.PRNGKey(0)
    # Matches the module's expected input: torch.randn([1, 448, 1, 1])
    x49 = jax.random.normal(key, (1, 448, 1, 1), dtype=jnp.float32)

    # Reference computed BEFORE the call (the input buffer is donated).
    ref = jax.nn.sigmoid(x49)

    out = sigmoid_pallas(x49)
    out = jax.block_until_ready(out)

    assert out.shape == (1, 448, 1, 1)
    assert out.dtype == jnp.float32
    assert jnp.allclose(out, ref, atol=2e-6, rtol=1e-5)

    print("KERNEL_OK")
</pallas_src>

<mosaic_0001>
module attributes {stable_mosaic.version = 11 : i64} {
  func.func @_sigmoid_kernel(%arg0: memref<1x448xf32, #tpu.memory_space<vmem>>, %arg1: memref<1x448xf32, #tpu.memory_space<vmem>>) attributes {dimension_semantics = [], scalar_prefetch = 0 : i64, scratch_operands = 0 : i64, tpu.core_type = #tpu.core_type<tc>} {
    %c0 = arith.constant 0 : index
    %c0_0 = arith.constant 0 : index
    %0 = vector.load %arg0[%c0, %c0_0] : memref<1x448xf32, #tpu.memory_space<vmem>>, vector<1x448xf32>
    %1 = arith.negf %0 : vector<1x448xf32>
    %2 = math.exp %1 : vector<1x448xf32>
    %cst = arith.constant 1.000000e+00 : f32
    %3 = vector.broadcast %cst : f32 to vector<1x448xf32>
    %4 = arith.addf %3, %2 : vector<1x448xf32>
    %5 = arith.divf %3, %4 : vector<1x448xf32>
    %c0_1 = arith.constant 0 : index
    %c0_2 = arith.constant 0 : index
    %6 = vector.load %arg1[%c0_1, %c0_2] : memref<1x448xf32, #tpu.memory_space<vmem>>, vector<1x448xf32>
    tpu.vector_store %arg1[%c0_1, %c0_2], %5 {strides = array<i32>} : memref<1x448xf32, #tpu.memory_space<vmem>>, vector<1x448xf32>,
    return
  }
}

</mosaic_0001>

<llo_original>
// kernel: _sigmoid_pallas_jit.1
$region0: #{_sigmoid_pallas_jit.1}
  #allocation0 [shape = 'u32[]', space=smem, size = 0x4, offset = 0x4, fixed_abs, tag = 'smem constant byte address 0x4 - core index']
  #allocation1 [shape = 'u32[144,128]{1,0:T(1,128)}', space=vmem, size = 0x12000, scoped, tag = 'internal scratch']
  %s0 = inlined_call_operand.vmem [shape: f32[1,448], index: 0, kind: input, shape index: {}, may-alias: {0,1}]
  %s1 = inlined_call_operand.vmem [shape: f32[1,448], index: 1, kind: output, shape index: {}, may-alias: {0,1}]
  %s2 = sld [smem:[#allocation0]]
  $region14: #{_sigmoid_pallas_jit.1} parent=0
    _
  %s4 = ssub.s32 1, %s2
  %s5 = scalar_select 0, %s4, %s2
  // Predicated region
  $region2: #{_sigmoid_pallas_jit.1} parent=0 // pred_check
    _
  $region3: #{_sigmoid_pallas_jit.1} parent=0 // pred_check_branch
    %7 = sbr.rel (0) target = $region5
  $region4: #{_sigmoid_pallas_jit.1} parent=0 // pred_region
    _
  $region5: #{_sigmoid_pallas_jit.1} parent=0 // pred_fallthru
    _
  %v8 = vld [vmem:[%s0] sm:$0xf]
  %v9 = vxor.u32 %v8, 2147483648
  %v10 = vmul.f32 %v9, 1.442695
  %v11 = vpow.pop %v10
  %v12 = vadd.f32 %v11, 1.0
  %v13 = vrcp.pop %v12
  %v14 = vmul.f32 1.0, %v13
  %v15 = vlaneseq
  %vm16 = vcmp.ge.s32.totalorder %v15, 0
  %vm17 = vcmp.lt.s32.totalorder %v15, 448
  %vm18 = vmand %vm16, %vm17
  %19 = vst.msk [vmem:[%s1] sm:$0xf] %vm18, %v14
  // Predicated region
  $region6: #{_sigmoid_pallas_jit.1} parent=0 // pred_check
    _
  $region7: #{_sigmoid_pallas_jit.1} parent=0 // pred_check_branch
    %21 = sbr.rel (0) target = $region9
  $region8: #{_sigmoid_pallas_jit.1} parent=0 // pred_region
    _
  $region9: #{_sigmoid_pallas_jit.1} parent=0 // pred_fallthru
    _
  // Predicated region
  $region10: #{_sigmoid_pallas_jit.1} parent=0 // pred_check
    _
  $region11: #{_sigmoid_pallas_jit.1} parent=0 // pred_check_branch
    %23 = sbr.rel (0) target = $region13
  $region12: #{_sigmoid_pallas_jit.1} parent=0 // pred_region
    _
  $region13: #{_sigmoid_pallas_jit.1} parent=0 // pred_fallthru
    _

</llo_original>
